<compile_context>
chip_gen: v6e
topology: v6e:2x2x1
jax: 0.10.0
libtpu: 0.0.40
codegen_flags: <defaults>
</compile_context>

<pallas_src>
import jax
import jax.numpy as jnp
from jax.experimental import pallas as pl
from jax.experimental.pallas import tpu as pltpu

_LANES = 128
# Beyond this many timesteps, the hoisted input-projection list / full unroll
# would start costing vregs and code size; switch to computing inp[t] inline
# in the unrolled loop and to lax.fori_loop(..., unroll=k) past ~32 steps.
_HOIST_UNROLL_LIMIT = 32


def _vanilla_rnn_kernel(x_ref, whx_ref, whh_ref, bh_ref, wph_ref, bp_ref, out_ref):
    B, T = x_ref.shape
    assert T <= _HOIST_UNROLL_LIMIT, "switch to inline inp + fori_loop for long T"

    x = x_ref[...]          # (B, T)  f32
    whx = whx_ref[...]      # (1, H)  f32
    whh = whh_ref[...]      # (H, H)  f32 or bf16 (weights dtype)
    bh = bh_ref[...]        # (B, H)  f32
    w_dtype = whh.dtype

    # Input projection + bias for every step, hoisted off the serial h-chain.
    # With input_dim == 1, x[:, t, None] @ Whx is an outer product -> VPU
    # broadcasted multiply. Static slices, computed once, and they overlap
    # freely with the recurrence's MXU work (XLU/VPU have slack while the
    # serial MXU chain stalls).
    inp = [x[:, t:t + 1] * whx + bh for t in range(T)]   # each (B, H) f32

    # Peel t = 0: h starts at zero, so the recurrent matmul is exactly zero.
    h = jnp.tanh(inp[0])                                  # f32

    # Fully unrolled serial recurrence: (cast ->) dot + add + tanh only.
    # h is kept in f32 between steps; only the dot operands drop to the
    # weights dtype when bf16 weights are used.
    for t in range(1, T):
        hw = h.astype(w_dtype)
        h = jnp.tanh(inp[t]
                     + jnp.dot(hw, whh, preferred_element_type=jnp.float32))

    # Lane-dense classifier store: wph_ref / bp_ref are pre-padded to a
    # multiple of 128 output lanes (done once at parameter-prep time), so this
    # is an unmasked full-lane vst.
    wph = wph_ref[...]
    out_ref[...] = (
        jnp.dot(h.astype(wph.dtype), wph, preferred_element_type=jnp.float32)
        + bp_ref[...]
    )


def prepare_params(whx, whh, bh, wph, bp, *, weights_dtype=jnp.float32):
    """One-time parameter prep (call at init, NOT per forward).

    - Zero-pads Wph / bp to a lane-dense (multiple-of-128) output width.
    - Optionally casts the two MXU weight matrices (Whh, padded Wph) to
      `weights_dtype` (e.g. jnp.bfloat16). Biases and Whx stay f32.
    Returns (params_tuple, num_classes).
    """
    H, C = wph.shape
    B = bp.shape[0]
    assert whx.ndim == 2 and whx.shape[1] == H, "Whx must be (input_dim, H)"
    assert whh.shape == (H, H)
    assert bh.shape == (B, H), "bh must be the module's (batch, H) bias"
    assert bp.shape == (B, C), "bp must be the module's (batch, C) bias"

    Cp = max(_LANES, ((C + _LANES - 1) // _LANES) * _LANES)
    wph_p = jnp.pad(wph, ((0, 0), (0, Cp - C))).astype(weights_dtype)
    bp_p = jnp.pad(bp, ((0, 0), (0, Cp - C))).astype(jnp.float32)

    params = (
        whx.astype(jnp.float32),
        whh.astype(weights_dtype),
        bh.astype(jnp.float32),
        wph_p,
        bp_p,
    )
    return params, C


def vanilla_rnn_forward(x, params, num_classes):
    """x: (B, T) f32; params from prepare_params(). Returns (B, num_classes)."""
    whx, whh, bh, wph_p, bp_p = params
    B, _ = x.shape
    H = whh.shape[0]
    Cp = wph_p.shape[1]
    assert bh.shape == (B, H)
    assert bp_p.shape == (B, Cp)

    vmem = pl.BlockSpec(memory_space=pltpu.MemorySpace.VMEM)
    out = pl.pallas_call(
        _vanilla_rnn_kernel,
        out_shape=jax.ShapeDtypeStruct((B, Cp), jnp.float32),
        in_specs=[vmem] * 6,
        out_specs=vmem,
    )(x, whx, whh, bh, wph_p, bp_p)
    # Padded columns of Wph/bp are exact zeros, so this slice is exact.
    return out[:, :num_classes]


def _kaiming_normal(key, shape):
    # torch.nn.init.kaiming_normal_: std = sqrt(2 / fan_in), fan_in = shape[1]
    fan_in = shape[1]
    std = (2.0 / fan_in) ** 0.5
    return jax.random.normal(key, shape, dtype=jnp.float32) * std


def _reference(x, whx, whh, bh, wph, bp):
    B = x.shape[0]
    H = whh.shape[0]
    h = jnp.zeros((B, H), dtype=jnp.float32)
    for t in range(x.shape[1]):
        h = jnp.tanh(x[:, t, None] @ whx + h @ whh + bh)
    return h @ wph + bp


if __name__ == "__main__":
    # Shapes implied by the module's forward: x[:, t, None] @ Whx requires
    # input_dim == 1, so x is (batch, seq_length).
    batch, seq_length, input_dim, num_hidden, num_classes = 8, 8, 1, 128, 10

    key = jax.random.PRNGKey(0)
    k_x, k_whx, k_whh, k_wph = jax.random.split(key, 4)

    x = jax.random.normal(k_x, (batch, seq_length), dtype=jnp.float32)
    whx = _kaiming_normal(k_whx, (input_dim, num_hidden))
    whh = _kaiming_normal(k_whh, (num_hidden, num_hidden))
    wph = _kaiming_normal(k_wph, (num_hidden, num_classes))
    bh = jnp.zeros((batch, num_hidden), dtype=jnp.float32)
    bp = jnp.zeros((batch, num_classes), dtype=jnp.float32)

    ref = _reference(x, whx, whh, bh, wph, bp)

    # f32 weights (default): bit-faithful to the PyTorch module.
    params_f32, C = prepare_params(whx, whh, bh, wph, bp,
                                   weights_dtype=jnp.float32)
    out_f32 = vanilla_rnn_forward(x, params_f32, C)
    jax.block_until_ready(out_f32)
    assert out_f32.shape == (batch, num_classes)
    assert jnp.allclose(out_f32, ref, atol=1e-5, rtol=1e-5)

    # bf16 weights (optional fast path): ~2-3x shorter per-step MXU latency on
    # the serial chain; looser check against the f32 reference by design.
    params_bf16, _ = prepare_params(whx, whh, bh, wph, bp,
                                    weights_dtype=jnp.bfloat16)
    out_bf16 = vanilla_rnn_forward(x, params_bf16, C)
    jax.block_until_ready(out_bf16)
    assert out_bf16.shape == (batch, num_classes)
    assert jnp.isfinite(out_bf16).all()
    assert float(jnp.max(jnp.abs(out_bf16 - ref))) < 0.25

    print("KERNEL_OK")
</pallas_src>

<mosaic_0001>
module attributes {stable_mosaic.version = 11 : i64} {
  func.func @_vanilla_rnn_kernel(%arg0: memref<8x8xf32, #tpu.memory_space<vmem>>, %arg1: memref<1x128xf32, #tpu.memory_space<vmem>>, %arg2: memref<128x128xf32, #tpu.memory_space<vmem>>, %arg3: memref<8x128xf32, #tpu.memory_space<vmem>>, %arg4: memref<128x128xf32, #tpu.memory_space<vmem>>, %arg5: memref<8x128xf32, #tpu.memory_space<vmem>>, %arg6: memref<8x128xf32, #tpu.memory_space<vmem>>) attributes {dimension_semantics = [], scalar_prefetch = 0 : i64, scratch_operands = 0 : i64, tpu.core_type = #tpu.core_type<tc>} {
    %c0 = arith.constant 0 : index
    %c0_0 = arith.constant 0 : index
    %0 = vector.load %arg0[%c0, %c0_0] : memref<8x8xf32, #tpu.memory_space<vmem>>, vector<8x8xf32>
    %c0_1 = arith.constant 0 : index
    %c0_2 = arith.constant 0 : index
    %1 = vector.load %arg1[%c0_1, %c0_2] : memref<1x128xf32, #tpu.memory_space<vmem>>, vector<1x128xf32>
    %c0_3 = arith.constant 0 : index
    %c0_4 = arith.constant 0 : index
    %2 = vector.load %arg2[%c0_3, %c0_4] : memref<128x128xf32, #tpu.memory_space<vmem>>, vector<128x128xf32>
    %c0_5 = arith.constant 0 : index
    %c0_6 = arith.constant 0 : index
    %3 = vector.load %arg3[%c0_5, %c0_6] : memref<8x128xf32, #tpu.memory_space<vmem>>, vector<8x128xf32>
    %4 = vector.extract_strided_slice %0 {offsets = [0, 0], sizes = [8, 1], strides = [1, 1]} : vector<8x8xf32> to vector<8x1xf32>
    %5 = vector.broadcast %4 : vector<8x1xf32> to vector<8x128xf32>
    %6 = vector.broadcast %1 : vector<1x128xf32> to vector<8x128xf32>
    %7 = arith.mulf %5, %6 : vector<8x128xf32>
    %8 = arith.addf %7, %3 : vector<8x128xf32>
    %9 = vector.extract_strided_slice %0 {offsets = [0, 1], sizes = [8, 1], strides = [1, 1]} : vector<8x8xf32> to vector<8x1xf32>
    %10 = vector.broadcast %9 : vector<8x1xf32> to vector<8x128xf32>
    %11 = vector.broadcast %1 : vector<1x128xf32> to vector<8x128xf32>
    %12 = arith.mulf %10, %11 : vector<8x128xf32>
    %13 = arith.addf %12, %3 : vector<8x128xf32>
    %14 = vector.extract_strided_slice %0 {offsets = [0, 2], sizes = [8, 1], strides = [1, 1]} : vector<8x8xf32> to vector<8x1xf32>
    %15 = vector.broadcast %14 : vector<8x1xf32> to vector<8x128xf32>
    %16 = vector.broadcast %1 : vector<1x128xf32> to vector<8x128xf32>
    %17 = arith.mulf %15, %16 : vector<8x128xf32>
    %18 = arith.addf %17, %3 : vector<8x128xf32>
    %19 = vector.extract_strided_slice %0 {offsets = [0, 3], sizes = [8, 1], strides = [1, 1]} : vector<8x8xf32> to vector<8x1xf32>
    %20 = vector.broadcast %19 : vector<8x1xf32> to vector<8x128xf32>
    %21 = vector.broadcast %1 : vector<1x128xf32> to vector<8x128xf32>
    %22 = arith.mulf %20, %21 : vector<8x128xf32>
    %23 = arith.addf %22, %3 : vector<8x128xf32>
    %24 = vector.extract_strided_slice %0 {offsets = [0, 4], sizes = [8, 1], strides = [1, 1]} : vector<8x8xf32> to vector<8x1xf32>
    %25 = vector.broadcast %24 : vector<8x1xf32> to vector<8x128xf32>
    %26 = vector.broadcast %1 : vector<1x128xf32> to vector<8x128xf32>
    %27 = arith.mulf %25, %26 : vector<8x128xf32>
    %28 = arith.addf %27, %3 : vector<8x128xf32>
    %29 = vector.extract_strided_slice %0 {offsets = [0, 5], sizes = [8, 1], strides = [1, 1]} : vector<8x8xf32> to vector<8x1xf32>
    %30 = vector.broadcast %29 : vector<8x1xf32> to vector<8x128xf32>
    %31 = vector.broadcast %1 : vector<1x128xf32> to vector<8x128xf32>
    %32 = arith.mulf %30, %31 : vector<8x128xf32>
    %33 = arith.addf %32, %3 : vector<8x128xf32>
    %34 = vector.extract_strided_slice %0 {offsets = [0, 6], sizes = [8, 1], strides = [1, 1]} : vector<8x8xf32> to vector<8x1xf32>
    %35 = vector.broadcast %34 : vector<8x1xf32> to vector<8x128xf32>
    %36 = vector.broadcast %1 : vector<1x128xf32> to vector<8x128xf32>
    %37 = arith.mulf %35, %36 : vector<8x128xf32>
    %38 = arith.addf %37, %3 : vector<8x128xf32>
    %39 = vector.extract_strided_slice %0 {offsets = [0, 7], sizes = [8, 1], strides = [1, 1]} : vector<8x8xf32> to vector<8x1xf32>
    %40 = vector.broadcast %39 : vector<8x1xf32> to vector<8x128xf32>
    %41 = vector.broadcast %1 : vector<1x128xf32> to vector<8x128xf32>
    %42 = arith.mulf %40, %41 : vector<8x128xf32>
    %43 = arith.addf %42, %3 : vector<8x128xf32>
    %44 = math.tanh %8 : vector<8x128xf32>
    %cst = arith.constant dense<0.000000e+00> : vector<8x128xf32>
    %45 = tpu.matmul %44, %2, %cst {dimension_numbers = #tpu.dot_dimension_numbers<[1], [0], [0], [1], [0, 0, 1, 1], [], []>} : vector<8x128xf32>, vector<128x128xf32>, vector<8x128xf32> -> vector<8x128xf32>
    %46 = arith.addf %13, %45 : vector<8x128xf32>
    %47 = math.tanh %46 : vector<8x128xf32>
    %cst_7 = arith.constant dense<0.000000e+00> : vector<8x128xf32>
    %48 = tpu.matmul %47, %2, %cst_7 {dimension_numbers = #tpu.dot_dimension_numbers<[1], [0], [0], [1], [0, 0, 1, 1], [], []>} : vector<8x128xf32>, vector<128x128xf32>, vector<8x128xf32> -> vector<8x128xf32>
    %49 = arith.addf %18, %48 : vector<8x128xf32>
    %50 = math.tanh %49 : vector<8x128xf32>
    %cst_8 = arith.constant dense<0.000000e+00> : vector<8x128xf32>
    %51 = tpu.matmul %50, %2, %cst_8 {dimension_numbers = #tpu.dot_dimension_numbers<[1], [0], [0], [1], [0, 0, 1, 1], [], []>} : vector<8x128xf32>, vector<128x128xf32>, vector<8x128xf32> -> vector<8x128xf32>
    %52 = arith.addf %23, %51 : vector<8x128xf32>
    %53 = math.tanh %52 : vector<8x128xf32>
    %cst_9 = arith.constant dense<0.000000e+00> : vector<8x128xf32>
    %54 = tpu.matmul %53, %2, %cst_9 {dimension_numbers = #tpu.dot_dimension_numbers<[1], [0], [0], [1], [0, 0, 1, 1], [], []>} : vector<8x128xf32>, vector<128x128xf32>, vector<8x128xf32> -> vector<8x128xf32>
    %55 = arith.addf %28, %54 : vector<8x128xf32>
    %56 = math.tanh %55 : vector<8x128xf32>
    %cst_10 = arith.constant dense<0.000000e+00> : vector<8x128xf32>
    %57 = tpu.matmul %56, %2, %cst_10 {dimension_numbers = #tpu.dot_dimension_numbers<[1], [0], [0], [1], [0, 0, 1, 1], [], []>} : vector<8x128xf32>, vector<128x128xf32>, vector<8x128xf32> -> vector<8x128xf32>
    %58 = arith.addf %33, %57 : vector<8x128xf32>
    %59 = math.tanh %58 : vector<8x128xf32>
    %cst_11 = arith.constant dense<0.000000e+00> : vector<8x128xf32>
    %60 = tpu.matmul %59, %2, %cst_11 {dimension_numbers = #tpu.dot_dimension_numbers<[1], [0], [0], [1], [0, 0, 1, 1], [], []>} : vector<8x128xf32>, vector<128x128xf32>, vector<8x128xf32> -> vector<8x128xf32>
    %61 = arith.addf %38, %60 : vector<8x128xf32>
    %62 = math.tanh %61 : vector<8x128xf32>
    %cst_12 = arith.constant dense<0.000000e+00> : vector<8x128xf32>
    %63 = tpu.matmul %62, %2, %cst_12 {dimension_numbers = #tpu.dot_dimension_numbers<[1], [0], [0], [1], [0, 0, 1, 1], [], []>} : vector<8x128xf32>, vector<128x128xf32>, vector<8x128xf32> -> vector<8x128xf32>
    %64 = arith.addf %43, %63 : vector<8x128xf32>
    %65 = math.tanh %64 : vector<8x128xf32>
    %c0_13 = arith.constant 0 : index
    %c0_14 = arith.constant 0 : index
    %66 = vector.load %arg4[%c0_13, %c0_14] : memref<128x128xf32, #tpu.memory_space<vmem>>, vector<128x128xf32>
    %cst_15 = arith.constant dense<0.000000e+00> : vector<8x128xf32>
    %67 = tpu.matmul %65, %66, %cst_15 {dimension_numbers = #tpu.dot_dimension_numbers<[1], [0], [0], [1], [0, 0, 1, 1], [], []>} : vector<8x128xf32>, vector<128x128xf32>, vector<8x128xf32> -> vector<8x128xf32>
    %c0_16 = arith.constant 0 : index
    %c0_17 = arith.constant 0 : index
    %68 = vector.load %arg5[%c0_16, %c0_17] : memref<8x128xf32, #tpu.memory_space<vmem>>, vector<8x128xf32>
    %69 = arith.addf %67, %68 : vector<8x128xf32>
    %c0_18 = arith.constant 0 : index
    %c0_19 = arith.constant 0 : index
    %70 = vector.load %arg6[%c0_18, %c0_19] : memref<8x128xf32, #tpu.memory_space<vmem>>, vector<8x128xf32>
    tpu.vector_store %arg6[%c0_18, %c0_19], %69 {strides = array<i32>} : memref<8x128xf32, #tpu.memory_space<vmem>>, vector<8x128xf32>,
    return
  }
}

</mosaic_0001>

<llo_original>
// kernel: tpu_custom_call.1
$region0: #{tpu_custom_call.1}
  #allocation0 [shape = 'u32[]', space=smem, size = 0x4, offset = 0x4, fixed_abs, tag = 'smem constant byte address 0x4 - core index']
  #allocation1 [shape = 'u32[144,128]{1,0:T(1,128)}', space=vmem, size = 0x12000, scoped, tag = 'internal scratch']
  %s0 = inlined_call_operand.hbm [shape: f32[8,8], index: 0, kind: input, shape index: {}]
  %s1 = inlined_call_operand.vmem [shape: f32[1,128], index: 1, kind: input, shape index: {}]
  %s2 = inlined_call_operand.hbm [shape: f32[128,128], index: 2, kind: input, shape index: {}]
  %s3 = inlined_call_operand.hbm [shape: f32[8,128], index: 3, kind: input, shape index: {}]
  %s4 = inlined_call_operand.hbm [shape: f32[128,128], index: 4, kind: input, shape index: {}]
  %s5 = inlined_call_operand.vmem [shape: f32[8,128], index: 5, kind: input, shape index: {}]
  %s6 = inlined_call_operand.hbm [shape: f32[8,128], index: 6, kind: output, shape index: {}]
  %s7 = sld [smem:[#allocation0]]
  $region50: #{tpu_custom_call.1} parent=0
    _
  %s9 = ssub.s32 1, %s7
  %s10 = scalar_select 0, %s9, %s7
  $region1: #{tpu_custom_call.1} parent=0
    #allocation2 [shape = 'u8[4096]{0}', space=vmem, size = 0x1000, scoped, tag = 'input window, operand 0, single buffered']
    #allocation3 [shape = 's32[1]{0}', space=sflag, size = 0x4, scoped, tag = 'scoped memory for tpu_custom_call.1']
    #allocation4 [shape = 's32[1]{0}', space=sflag, size = 0x4, scoped, tag = 'scoped memory for tpu_custom_call.1']
    #allocation5 [shape = 'u8[65536]{0}', space=vmem, size = 0x10000, scoped, tag = 'input window, operand 2, single buffered']
    #allocation6 [shape = 's32[1]{0}', space=sflag, size = 0x4, scoped, tag = 'scoped memory for tpu_custom_call.1']
    #allocation7 [shape = 'u8[4096]{0}', space=vmem, size = 0x1000, scoped, tag = 'input window, operand 3, single buffered']
    #allocation8 [shape = 'u8[65536]{0}', space=vmem, size = 0x10000, scoped, tag = 'input window, operand 4, single buffered']
    #allocation9 [shape = 's32[1]{0}', space=sflag, size = 0x4, scoped, tag = 'scoped memory for tpu_custom_call.1']
    #allocation10 [shape = 'u8[4096]{0}', space=vmem, size = 0x1000, scoped, tag = 'output window, operand 0, single buffered']
    %11 = vsyncpa [#allocation3], 0
    %12 = vsyncpa [#allocation6], 0
    %13 = vsyncpa [#allocation9], 0
    %14 = vsyncpa [#allocation4], 0
    // Predicated region
    $region2: #{tpu_custom_call.1} parent=1 // pred_check
      _
    $region3: #{tpu_custom_call.1} parent=1 // pred_check_branch
      %16 = sbr.rel (0) target = $region5
    $region4: #{tpu_custom_call.1} parent=1 // pred_region
      %s18 = ssub.s32 128, 128
      %19 = vsyncadd [#allocation3], %s18
      %s21 = sshll.u32 [#allocation2], 4
      %s22 = int_to_ptr.vmem [resolvable:$true] %s21
      %24 = dma.hbm_to_vmem [thread:$0]  %s0, 128, %s22, [#allocation3]
    $region5: #{tpu_custom_call.1} parent=1 // pred_fallthru
      _
    // Predicated region
    $region6: #{tpu_custom_call.1} parent=1 // pred_check
      _
    $region7: #{tpu_custom_call.1} parent=1 // pred_check_branch
      %26 = sbr.rel (0) target = $region9
    $region8: #{tpu_custom_call.1} parent=1 // pred_region
      _
    $region9: #{tpu_custom_call.1} parent=1 // pred_fallthru
      _
    // Predicated region
    $region10: #{tpu_custom_call.1} parent=1 // pred_check
      _
    $region11: #{tpu_custom_call.1} parent=1 // pred_check_branch
      %28 = sbr.rel (0) target = $region13
    $region12: #{tpu_custom_call.1} parent=1 // pred_region
      %s30 = ssub.s32 2048, 2048
      %31 = vsyncadd [#allocation6], %s30
      %s32 = sshll.u32 [#allocation5], 4
      %s33 = int_to_ptr.vmem [resolvable:$true] %s32
      %38 = dma.hbm_to_vmem [thread:$0]  %s2, 2048, %s33, [#allocation6], 128, 128, 8
    $region13: #{tpu_custom_call.1} parent=1 // pred_fallthru
      _
    // Predicated region
    $region14: #{tpu_custom_call.1} parent=1 // pred_check
      _
    $region15: #{tpu_custom_call.1} parent=1 // pred_check_branch
      %40 = sbr.rel (0) target = $region17
    $region16: #{tpu_custom_call.1} parent=1 // pred_region
      %s42 = ssub.s32 128, 128
      %43 = vsyncadd [#allocation6], %s42
      %s45 = sshll.u32 [#allocation7], 4
      %s46 = int_to_ptr.vmem [resolvable:$true] %s45
      %48 = dma.hbm_to_vmem [thread:$0]  %s3, 128, %s46, [#allocation6]
    $region17: #{tpu_custom_call.1} parent=1 // pred_fallthru
      _
    // Predicated region
    $region18: #{tpu_custom_call.1} parent=1 // pred_check
      _
    $region19: #{tpu_custom_call.1} parent=1 // pred_check_branch
      %50 = sbr.rel (0) target = $region21
    $region20: #{tpu_custom_call.1} parent=1 // pred_region
      %s52 = ssub.s32 2048, 2048
      %53 = vsyncadd [#allocation9], %s52
      %s54 = sshll.u32 [#allocation8], 4
      %s55 = int_to_ptr.vmem [resolvable:$true] %s54
      %60 = dma.hbm_to_vmem [thread:$0]  %s4, 2048, %s55, [#allocation9], 128, 128, 8
    $region21: #{tpu_custom_call.1} parent=1 // pred_fallthru
      _
    // Predicated region
    $region22: #{tpu_custom_call.1} parent=1 // pred_check
      _
    $region23: #{tpu_custom_call.1} parent=1 // pred_check_branch
      %62 = sbr.rel (0) target = $region25
    $region24: #{tpu_custom_call.1} parent=1 // pred_region
      _
    $region25: #{tpu_custom_call.1} parent=1 // pred_fallthru
      _
    // Predicated region
    $region26: #{tpu_custom_call.1} parent=1 // pred_check
      _
    $region27: #{tpu_custom_call.1} parent=1 // pred_check_branch
      %64 = sbr.rel (0) target = $region29
    $region28: #{tpu_custom_call.1} parent=1 // pred_region
      %65 = dma.done [#allocation3], 128
    $region29: #{tpu_custom_call.1} parent=1 // pred_fallthru
      _
    // Predicated region
    $region30: #{tpu_custom_call.1} parent=1 // pred_check
      _
    $region31: #{tpu_custom_call.1} parent=1 // pred_check_branch
      %67 = sbr.rel (0) target = $region33
    $region32: #{tpu_custom_call.1} parent=1 // pred_region
      %68 = dma.done [#allocation6], 2048
    $region33: #{tpu_custom_call.1} parent=1 // pred_fallthru
      _
    // Predicated region
    $region34: #{tpu_custom_call.1} parent=1 // pred_check
      _
    $region35: #{tpu_custom_call.1} parent=1 // pred_check_branch
      %70 = sbr.rel (0) target = $region37
    $region36: #{tpu_custom_call.1} parent=1 // pred_region
      %71 = dma.done [#allocation6], 128
    $region37: #{tpu_custom_call.1} parent=1 // pred_fallthru
      _
    // Predicated region
    $region38: #{tpu_custom_call.1} parent=1 // pred_check
      _
    $region39: #{tpu_custom_call.1} parent=1 // pred_check_branch
      %73 = sbr.rel (0) target = $region41
    $region40: #{tpu_custom_call.1} parent=1 // pred_region
      %74 = dma.done [#allocation9], 2048
    $region41: #{tpu_custom_call.1} parent=1 // pred_fallthru
      _
    %v75 = vld [vmem:[#allocation2] sm:$0xff]
    %v76 = vld [vmem:[%s1] sm:$0x1]
    %v77 = vld [vmem:[#allocation5] sm:$0xff]
    %v78 = vld [vmem:[#allocation5 + $0x8] sm:$0xff]
    %v79 = vld [vmem:[#allocation5 + $0x10] sm:$0xff]
    %v80 = vld [vmem:[#allocation5 + $0x18] sm:$0xff]
    %v81 = vld [vmem:[#allocation5 + $0x20] sm:$0xff]
    %v82 = vld [vmem:[#allocation5 + $0x28] sm:$0xff]
    %v83 = vld [vmem:[#allocation5 + $0x30] sm:$0xff]
    %v84 = vld [vmem:[#allocation5 + $0x38] sm:$0xff]
    %v85 = vld [vmem:[#allocation5 + $0x40] sm:$0xff]
    %v86 = vld [vmem:[#allocation5 + $0x48] sm:$0xff]
    %v87 = vld [vmem:[#allocation5 + $0x50] sm:$0xff]
    %v88 = vld [vmem:[#allocation5 + $0x58] sm:$0xff]
    %v89 = vld [vmem:[#allocation5 + $0x60] sm:$0xff]
    %v90 = vld [vmem:[#allocation5 + $0x68] sm:$0xff]
    %v91 = vld [vmem:[#allocation5 + $0x70] sm:$0xff]
    %v92 = vld [vmem:[#allocation5 + $0x78] sm:$0xff]
    %v93 = vld [vmem:[#allocation7] sm:$0xff]
    %95 = vset.pattern.permute.xlu0 0
    %96 = vperm.xlu0 %95, %v75
    %v97 = vpop.permute.xlu0 %96
    %v100 = vlaneseq
    %v101 = vshrl.u32 %v100, 7
    %v102 = vsub.s32 0, %v101
    %v103 = vrot.slane %v76, %v102
    %v105 = vmul.f32 %v97, %v103
    %v106 = vadd.f32 %v105, %v93
    %107 = vset.pattern.permute.xlu0 1
    %108 = vperm.xlu0 %107, %v75
    %v109 = vpop.permute.xlu0 %108
    %v111 = vmul.f32 %v109, %v103
    %v112 = vadd.f32 %v111, %v93
    %113 = vset.pattern.permute.xlu0 2
    %114 = vperm.xlu0 %113, %v75
    %v115 = vpop.permute.xlu0 %114
    %v117 = vmul.f32 %v115, %v103
    %v118 = vadd.f32 %v117, %v93
    %119 = vset.pattern.permute.xlu0 3
    %120 = vperm.xlu0 %119, %v75
    %v121 = vpop.permute.xlu0 %120
    %v123 = vmul.f32 %v121, %v103
    %v124 = vadd.f32 %v123, %v93
    %125 = vset.pattern.permute.xlu0 4
    %126 = vperm.xlu0 %125, %v75
    %v127 = vpop.permute.xlu0 %126
    %v129 = vmul.f32 %v127, %v103
    %v130 = vadd.f32 %v129, %v93
    %131 = vset.pattern.permute.xlu0 5
    %132 = vperm.xlu0 %131, %v75
    %v133 = vpop.permute.xlu0 %132
    %v135 = vmul.f32 %v133, %v103
    %v136 = vadd.f32 %v135, %v93
    %137 = vset.pattern.permute.xlu0 6
    %138 = vperm.xlu0 %137, %v75
    %v139 = vpop.permute.xlu0 %138
    %v141 = vmul.f32 %v139, %v103
    %v142 = vadd.f32 %v141, %v93
    %143 = vset.pattern.permute.xlu0 7
    %144 = vperm.xlu0 %143, %v75
    %v145 = vpop.permute.xlu0 %144
    %v147 = vmul.f32 %v145, %v103
    %v148 = vadd.f32 %v147, %v93
    %v149 = vtanh.pop %v106
    %150 = vmatprep.subr.mxu0 0.0
    %151 = vmatpush1.msra.mxu0 %v92
    %152 = vmatprep.subr.mxu0 0.0
    %153 = vmatpush1.msra.mxu0 %v91
    %154 = vmatprep.subr.mxu0 0.0
    %155 = vmatpush1.msra.mxu0 %v90
    %156 = vmatprep.subr.mxu0 0.0
    %157 = vmatpush1.msra.mxu0 %v89
    %158 = vmatprep.subr.mxu0 0.0
    %159 = vmatpush1.msra.mxu0 %v88
    %160 = vmatprep.subr.mxu0 0.0
    %161 = vmatpush1.msra.mxu0 %v87
    %162 = vmatprep.subr.mxu0 0.0
    %163 = vmatpush1.msra.mxu0 %v86
    %164 = vmatprep.subr.mxu0 0.0
    %165 = vmatpush1.msra.mxu0 %v85
    %166 = vmatprep.subr.mxu0 0.0
    %167 = vmatpush1.msra.mxu0 %v84
    %168 = vmatprep.subr.mxu0 0.0
    %169 = vmatpush1.msra.mxu0 %v83
    %170 = vmatprep.subr.mxu0 0.0
    %171 = vmatpush1.msra.mxu0 %v82
    %172 = vmatprep.subr.mxu0 0.0
    %173 = vmatpush1.msra.mxu0 %v81
    %174 = vmatprep.subr.mxu0 0.0
    %175 = vmatpush1.msra.mxu0 %v80
    %176 = vmatprep.subr.mxu0 0.0
    %177 = vmatpush1.msra.mxu0 %v79
    %178 = vmatprep.subr.mxu0 0.0
    %179 = vmatpush1.msra.mxu0 %v78
    %180 = vmatprep.subr.mxu0 0.0
    %181 = vmatpush1.msra.mxu0 %v77
    %182 = vmatprep.subr.mxu0 0.0
    %183 = vmatpush2.msra.mxu0 0.0
    %184 = vmatprep.subr.mxu0 0.0
    %185 = vmatpush2.msra.mxu0 0.0
    %186 = vmatprep.subr.mxu0 0.0
    %187 = vmatpush2.msra.mxu0 0.0
    %188 = vmatprep.subr.mxu0 0.0
    %189 = vmatpush2.msra.mxu0 0.0
    %190 = vmatprep.subr.mxu0 0.0
    %191 = vmatpush2.msra.mxu0 0.0
    %192 = vmatprep.subr.mxu0 0.0
    %193 = vmatpush2.msra.mxu0 0.0
    %194 = vmatprep.subr.mxu0 0.0
    %195 = vmatpush2.msra.mxu0 0.0
    %196 = vmatprep.subr.mxu0 0.0
    %197 = vmatpush2.msra.mxu0 0.0
    %198 = vmatprep.subr.mxu0 0.0
    %199 = vmatpush2.msra.mxu0 0.0
    %200 = vmatprep.subr.mxu0 0.0
    %201 = vmatpush2.msra.mxu0 0.0
    %202 = vmatprep.subr.mxu0 0.0
    %203 = vmatpush2.msra.mxu0 0.0
    %204 = vmatprep.subr.mxu0 0.0
    %205 = vmatpush2.msra.mxu0 0.0
    %206 = vmatprep.subr.mxu0 0.0
    %207 = vmatpush2.msra.mxu0 0.0
    %208 = vmatprep.subr.mxu0 0.0
    %209 = vmatpush2.msra.mxu0 0.0
    %210 = vmatprep.subr.mxu0 0.0
    %211 = vmatpush2.msra.mxu0 0.0
    %212 = vmatprep.subr.mxu0 0.0
    %213 = vmatpush2.msra.mxu0 0.0
    %214 = vmatprep.mubr.f32.mxu0 0.0
    %215 = vmatmul.mubr.f32.gmra.mxu0 %v149
    %v216 = vpop.f32.mrf.mxu0
    %v217 = vadd.f32 0.0, %v216
    %v218 = vpop.f32.mrf.mxu0
    %219 = vdwg.mxu0
    %v220 = vadd.f32 %v112, %v217
    %v221 = vtanh.pop %v220
    %222 = vmatprep.subr.mxu0 0.0
    %223 = vmatpush1.msra.mxu0 %v92
    %224 = vmatprep.subr.mxu0 0.0
    %225 = vmatpush1.msra.mxu0 %v91
    %226 = vmatprep.subr.mxu0 0.0
    %227 = vmatpush1.msra.mxu0 %v90
    %228 = vmatprep.subr.mxu0 0.0
    %229 = vmatpush1.msra.mxu0 %v89
    %230 = vmatprep.subr.mxu0 0.0
    %231 = vmatpush1.msra.mxu0 %v88
    %232 = vmatprep.subr.mxu0 0.0
    %233 = vmatpush1.msra.mxu0 %v87
    %234 = vmatprep.subr.mxu0 0.0
    %235 = vmatpush1.msra.mxu0 %v86
    %236 = vmatprep.subr.mxu0 0.0
    %237 = vmatpush1.msra.mxu0 %v85
    %238 = vmatprep.subr.mxu0 0.0
    %239 = vmatpush1.msra.mxu0 %v84
    %240 = vmatprep.subr.mxu0 0.0
    %241 = vmatpush1.msra.mxu0 %v83
    %242 = vmatprep.subr.mxu0 0.0
    %243 = vmatpush1.msra.mxu0 %v82
    %244 = vmatprep.subr.mxu0 0.0
    %245 = vmatpush1.msra.mxu0 %v81
    %246 = vmatprep.subr.mxu0 0.0
    %247 = vmatpush1.msra.mxu0 %v80
    %248 = vmatprep.subr.mxu0 0.0
    %249 = vmatpush1.msra.mxu0 %v79
    %250 = vmatprep.subr.mxu0 0.0
    %251 = vmatpush1.msra.mxu0 %v78
    %252 = vmatprep.subr.mxu0 0.0
    %253 = vmatpush1.msra.mxu0 %v77
    %254 = vmatprep.subr.mxu0 0.0
    %255 = vmatpush2.msra.mxu0 0.0
    %256 = vmatprep.subr.mxu0 0.0
    %257 = vmatpush2.msra.mxu0 0.0
    %258 = vmatprep.subr.mxu0 0.0
    %259 = vmatpush2.msra.mxu0 0.0
    %260 = vmatprep.subr.mxu0 0.0
    %261 = vmatpush2.msra.mxu0 0.0
    %262 = vmatprep.subr.mxu0 0.0
    %263 = vmatpush2.msra.mxu0 0.0
    %264 = vmatprep.subr.mxu0 0.0
    %265 = vmatpush2.msra.mxu0 0.0
    %266 = vmatprep.subr.mxu0 0.0
    %267 = vmatpush2.msra.mxu0 0.0
    %268 = vmatprep.subr.mxu0 0.0
    %269 = vmatpush2.msra.mxu0 0.0
    %270 = vmatprep.subr.mxu0 0.0
    %271 = vmatpush2.msra.mxu0 0.0
    %272 = vmatprep.subr.mxu0 0.0
    %273 = vmatpush2.msra.mxu0 0.0
    %274 = vmatprep.subr.mxu0 0.0
    %275 = vmatpush2.msra.mxu0 0.0
    %276 = vmatprep.subr.mxu0 0.0
    %277 = vmatpush2.msra.mxu0 0.0
    %278 = vmatprep.subr.mxu0 0.0
    %279 = vmatpush2.msra.mxu0 0.0
    %280 = vmatprep.subr.mxu0 0.0
    %281 = vmatpush2.msra.mxu0 0.0
    %282 = vmatprep.subr.mxu0 0.0
    %283 = vmatpush2.msra.mxu0 0.0
    %284 = vmatprep.subr.mxu0 0.0
    %285 = vmatpush2.msra.mxu0 0.0
    %286 = vmatprep.mubr.f32.mxu0 0.0
    %287 = vmatmul.mubr.f32.gmra.mxu0 %v221
    %v288 = vpop.f32.mrf.mxu0
    %v289 = vadd.f32 0.0, %v288
    %v290 = vpop.f32.mrf.mxu0
    %291 = vdwg.mxu0
    %v292 = vadd.f32 %v118, %v289
    %v293 = vtanh.pop %v292
    %294 = vmatprep.subr.mxu0 0.0
    %295 = vmatpush1.msra.mxu0 %v92
    %296 = vmatprep.subr.mxu0 0.0
    %297 = vmatpush1.msra.mxu0 %v91
    %298 = vmatprep.subr.mxu0 0.0
    %299 = vmatpush1.msra.mxu0 %v90
    %300 = vmatprep.subr.mxu0 0.0
    %301 = vmatpush1.msra.mxu0 %v89
    %302 = vmatprep.subr.mxu0 0.0
    %303 = vmatpush1.msra.mxu0 %v88
    %304 = vmatprep.subr.mxu0 0.0
    %305 = vmatpush1.msra.mxu0 %v87
    %306 = vmatprep.subr.mxu0 0.0
    %307 = vmatpush1.msra.mxu0 %v86
    %308 = vmatprep.subr.mxu0 0.0
    %309 = vmatpush1.msra.mxu0 %v85
    %310 = vmatprep.subr.mxu0 0.0
    %311 = vmatpush1.msra.mxu0 %v84
    %312 = vmatprep.subr.mxu0 0.0
    %313 = vmatpush1.msra.mxu0 %v83
    %314 = vmatprep.subr.mxu0 0.0
    %315 = vmatpush1.msra.mxu0 %v82
    %316 = vmatprep.subr.mxu0 0.0
    %317 = vmatpush1.msra.mxu0 %v81
    %318 = vmatprep.subr.mxu0 0.0
    %319 = vmatpush1.msra.mxu0 %v80
    %320 = vmatprep.subr.mxu0 0.0
    %321 = vmatpush1.msra.mxu0 %v79
    %322 = vmatprep.subr.mxu0 0.0
    %323 = vmatpush1.msra.mxu0 %v78
    %324 = vmatprep.subr.mxu0 0.0
    %325 = vmatpush1.msra.mxu0 %v77
    %326 = vmatprep.subr.mxu0 0.0
    %327 = vmatpush2.msra.mxu0 0.0
    %328 = vmatprep.subr.mxu0 0.0
    %329 = vmatpush2.msra.mxu0 0.0
    %330 = vmatprep.subr.mxu0 0.0
    %331 = vmatpush2.msra.mxu0 0.0
    %332 = vmatprep.subr.mxu0 0.0
    %333 = vmatpush2.msra.mxu0 0.0
    %334 = vmatprep.subr.mxu0 0.0
    %335 = vmatpush2.msra.mxu0 0.0
    %336 = vmatprep.subr.mxu0 0.0
    %337 = vmatpush2.msra.mxu0 0.0
    %338 = vmatprep.subr.mxu0 0.0
    %339 = vmatpush2.msra.mxu0 0.0
    %340 = vmatprep.subr.mxu0 0.0
    %341 = vmatpush2.msra.mxu0 0.0
    %342 = vmatprep.subr.mxu0 0.0
    %343 = vmatpush2.msra.mxu0 0.0
    %344 = vmatprep.subr.mxu0 0.0
    %345 = vmatpush2.msra.mxu0 0.0
    %346 = vmatprep.subr.mxu0 0.0
    %347 = vmatpush2.msra.mxu0 0.0
    %348 = vmatprep.subr.mxu0 0.0
    %349 = vmatpush2.msra.mxu0 0.0
    %350 = vmatprep.subr.mxu0 0.0
    %351 = vmatpush2.msra.mxu0 0.0
    %352 = vmatprep.subr.mxu0 0.0
    %353 = vmatpush2.msra.mxu0 0.0
    %354 = vmatprep.subr.mxu0 0.0
    %355 = vmatpush2.msra.mxu0 0.0
    %356 = vmatprep.subr.mxu0 0.0
    %357 = vmatpush2.msra.mxu0 0.0
    %358 = vmatprep.mubr.f32.mxu0 0.0
    %359 = vmatmul.mubr.f32.gmra.mxu0 %v293
    %v360 = vpop.f32.mrf.mxu0
    %v361 = vadd.f32 0.0, %v360
    %v362 = vpop.f32.mrf.mxu0
    %363 = vdwg.mxu0
    %v364 = vadd.f32 %v124, %v361
    %v365 = vtanh.pop %v364
    %366 = vmatprep.subr.mxu0 0.0
    %367 = vmatpush1.msra.mxu0 %v92
    %368 = vmatprep.subr.mxu0 0.0
    %369 = vmatpush1.msra.mxu0 %v91
    %370 = vmatprep.subr.mxu0 0.0
    %371 = vmatpush1.msra.mxu0 %v90
    %372 = vmatprep.subr.mxu0 0.0
    %373 = vmatpush1.msra.mxu0 %v89
    %374 = vmatprep.subr.mxu0 0.0
    %375 = vmatpush1.msra.mxu0 %v88
    %376 = vmatprep.subr.mxu0 0.0
    %377 = vmatpush1.msra.mxu0 %v87
    %378 = vmatprep.subr.mxu0 0.0
    %379 = vmatpush1.msra.mxu0 %v86
    %380 = vmatprep.subr.mxu0 0.0
    %381 = vmatpush1.msra.mxu0 %v85
    %382 = vmatprep.subr.mxu0 0.0
    %383 = vmatpush1.msra.mxu0 %v84
    %384 = vmatprep.subr.mxu0 0.0
    %385 = vmatpush1.msra.mxu0 %v83
    %386 = vmatprep.subr.mxu0 0.0
    %387 = vmatpush1.msra.mxu0 %v82
    %388 = vmatprep.subr.mxu0 0.0
    %389 = vmatpush1.msra.mxu0 %v81
    %390 = vmatprep.subr.mxu0 0.0
    %391 = vmatpush1.msra.mxu0 %v80
    %392 = vmatprep.subr.mxu0 0.0
    %393 = vmatpush1.msra.mxu0 %v79
    %394 = vmatprep.subr.mxu0 0.0
    %395 = vmatpush1.msra.mxu0 %v78
    %396 = vmatprep.subr.mxu0 0.0
    %397 = vmatpush1.msra.mxu0 %v77
    %398 = vmatprep.subr.mxu0 0.0
    %399 = vmatpush2.msra.mxu0 0.0
    %400 = vmatprep.subr.mxu0 0.0
    %401 = vmatpush2.msra.mxu0 0.0
    %402 = vmatprep.subr.mxu0 0.0
    %403 = vmatpush2.msra.mxu0 0.0
    %404 = vmatprep.subr.mxu0 0.0
    %405 = vmatpush2.msra.mxu0 0.0
    %406 = vmatprep.subr.mxu0 0.0
    %407 = vmatpush2.msra.mxu0 0.0
    %408 = vmatprep.subr.mxu0 0.0
    %409 = vmatpush2.msra.mxu0 0.0
    %410 = vmatprep.subr.mxu0 0.0
    %411 = vmatpush2.msra.mxu0 0.0
    %412 = vmatprep.subr.mxu0 0.0
    %413 = vmatpush2.msra.mxu0 0.0
    %414 = vmatprep.subr.mxu0 0.0
    %415 = vmatpush2.msra.mxu0 0.0
    %416 = vmatprep.subr.mxu0 0.0
    %417 = vmatpush2.msra.mxu0 0.0
    %418 = vmatprep.subr.mxu0 0.0
    %419 = vmatpush2.msra.mxu0 0.0
    %420 = vmatprep.subr.mxu0 0.0
    %421 = vmatpush2.msra.mxu0 0.0
    %422 = vmatprep.subr.mxu0 0.0
    %423 = vmatpush2.msra.mxu0 0.0
    %424 = vmatprep.subr.mxu0 0.0
    %425 = vmatpush2.msra.mxu0 0.0
    %426 = vmatprep.subr.mxu0 0.0
    %427 = vmatpush2.msra.mxu0 0.0
    %428 = vmatprep.subr.mxu0 0.0
    %429 = vmatpush2.msra.mxu0 0.0
    %430 = vmatprep.mubr.f32.mxu0 0.0
    %431 = vmatmul.mubr.f32.gmra.mxu0 %v365
    %v432 = vpop.f32.mrf.mxu0
    %v433 = vadd.f32 0.0, %v432
    %v434 = vpop.f32.mrf.mxu0
    %435 = vdwg.mxu0
    %v436 = vadd.f32 %v130, %v433
    %v437 = vtanh.pop %v436
    %438 = vmatprep.subr.mxu0 0.0
    %439 = vmatpush1.msra.mxu0 %v92
    %440 = vmatprep.subr.mxu0 0.0
    %441 = vmatpush1.msra.mxu0 %v91
    %442 = vmatprep.subr.mxu0 0.0
    %443 = vmatpush1.msra.mxu0 %v90
    %444 = vmatprep.subr.mxu0 0.0
    %445 = vmatpush1.msra.mxu0 %v89
    %446 = vmatprep.subr.mxu0 0.0
    %447 = vmatpush1.msra.mxu0 %v88
    %448 = vmatprep.subr.mxu0 0.0
    %449 = vmatpush1.msra.mxu0 %v87
    %450 = vmatprep.subr.mxu0 0.0
    %451 = vmatpush1.msra.mxu0 %v86
    %452 = vmatprep.subr.mxu0 0.0
    %453 = vmatpush1.msra.mxu0 %v85
    %454 = vmatprep.subr.mxu0 0.0
    %455 = vmatpush1.msra.mxu0 %v84
    %456 = vmatprep.subr.mxu0 0.0
    %457 = vmatpush1.msra.mxu0 %v83
    %458 = vmatprep.subr.mxu0 0.0
    %459 = vmatpush1.msra.mxu0 %v82
    %460 = vmatprep.subr.mxu0 0.0
    %461 = vmatpush1.msra.mxu0 %v81
    %462 = vmatprep.subr.mxu0 0.0
    %463 = vmatpush1.msra.mxu0 %v80
    %464 = vmatprep.subr.mxu0 0.0
    %465 = vmatpush1.msra.mxu0 %v79
    %466 = vmatprep.subr.mxu0 0.0
    %467 = vmatpush1.msra.mxu0 %v78
    %468 = vmatprep.subr.mxu0 0.0
    %469 = vmatpush1.msra.mxu0 %v77
    %470 = vmatprep.subr.mxu0 0.0
    %471 = vmatpush2.msra.mxu0 0.0
    %472 = vmatprep.subr.mxu0 0.0
    %473 = vmatpush2.msra.mxu0 0.0
    %474 = vmatprep.subr.mxu0 0.0
    %475 = vmatpush2.msra.mxu0 0.0
    %476 = vmatprep.subr.mxu0 0.0
    %477 = vmatpush2.msra.mxu0 0.0
    %478 = vmatprep.subr.mxu0 0.0
    %479 = vmatpush2.msra.mxu0 0.0
    %480 = vmatprep.subr.mxu0 0.0
    %481 = vmatpush2.msra.mxu0 0.0
    %482 = vmatprep.subr.mxu0 0.0
    %483 = vmatpush2.msra.mxu0 0.0
    %484 = vmatprep.subr.mxu0 0.0
    %485 = vmatpush2.msra.mxu0 0.0
    %486 = vmatprep.subr.mxu0 0.0
    %487 = vmatpush2.msra.mxu0 0.0
    %488 = vmatprep.subr.mxu0 0.0
    %489 = vmatpush2.msra.mxu0 0.0
    %490 = vmatprep.subr.mxu0 0.0
    %491 = vmatpush2.msra.mxu0 0.0
    %492 = vmatprep.subr.mxu0 0.0
    %493 = vmatpush2.msra.mxu0 0.0
    %494 = vmatprep.subr.mxu0 0.0
    %495 = vmatpush2.msra.mxu0 0.0
    %496 = vmatprep.subr.mxu0 0.0
    %497 = vmatpush2.msra.mxu0 0.0
    %498 = vmatprep.subr.mxu0 0.0
    %499 = vmatpush2.msra.mxu0 0.0
    %500 = vmatprep.subr.mxu0 0.0
    %501 = vmatpush2.msra.mxu0 0.0
    %502 = vmatprep.mubr.f32.mxu0 0.0
    %503 = vmatmul.mubr.f32.gmra.mxu0 %v437
    %v504 = vpop.f32.mrf.mxu0
    %v505 = vadd.f32 0.0, %v504
    %v506 = vpop.f32.mrf.mxu0
    %507 = vdwg.mxu0
    %v508 = vadd.f32 %v136, %v505
    %v509 = vtanh.pop %v508
    %510 = vmatprep.subr.mxu0 0.0
    %511 = vmatpush1.msra.mxu0 %v92
    %512 = vmatprep.subr.mxu0 0.0
    %513 = vmatpush1.msra.mxu0 %v91
    %514 = vmatprep.subr.mxu0 0.0
    %515 = vmatpush1.msra.mxu0 %v90
    %516 = vmatprep.subr.mxu0 0.0
    %517 = vmatpush1.msra.mxu0 %v89
    %518 = vmatprep.subr.mxu0 0.0
    %519 = vmatpush1.msra.mxu0 %v88
    %520 = vmatprep.subr.mxu0 0.0
    %521 = vmatpush1.msra.mxu0 %v87
    %522 = vmatprep.subr.mxu0 0.0
    %523 = vmatpush1.msra.mxu0 %v86
    %524 = vmatprep.subr.mxu0 0.0
    %525 = vmatpush1.msra.mxu0 %v85
    %526 = vmatprep.subr.mxu0 0.0
    %527 = vmatpush1.msra.mxu0 %v84
    %528 = vmatprep.subr.mxu0 0.0
    %529 = vmatpush1.msra.mxu0 %v83
    %530 = vmatprep.subr.mxu0 0.0
    %531 = vmatpush1.msra.mxu0 %v82
    %532 = vmatprep.subr.mxu0 0.0
    %533 = vmatpush1.msra.mxu0 %v81
    %534 = vmatprep.subr.mxu0 0.0
    %535 = vmatpush1.msra.mxu0 %v80
    %536 = vmatprep.subr.mxu0 0.0
    %537 = vmatpush1.msra.mxu0 %v79
    %538 = vmatprep.subr.mxu0 0.0
    %539 = vmatpush1.msra.mxu0 %v78
    %540 = vmatprep.subr.mxu0 0.0
    %541 = vmatpush1.msra.mxu0 %v77
    %542 = vmatprep.subr.mxu0 0.0
    %543 = vmatpush2.msra.mxu0 0.0
    %544 = vmatprep.subr.mxu0 0.0
    %545 = vmatpush2.msra.mxu0 0.0
    %546 = vmatprep.subr.mxu0 0.0
    %547 = vmatpush2.msra.mxu0 0.0
    %548 = vmatprep.subr.mxu0 0.0
    %549 = vmatpush2.msra.mxu0 0.0
    %550 = vmatprep.subr.mxu0 0.0
    %551 = vmatpush2.msra.mxu0 0.0
    %552 = vmatprep.subr.mxu0 0.0
    %553 = vmatpush2.msra.mxu0 0.0
    %554 = vmatprep.subr.mxu0 0.0
    %555 = vmatpush2.msra.mxu0 0.0
    %556 = vmatprep.subr.mxu0 0.0
    %557 = vmatpush2.msra.mxu0 0.0
    %558 = vmatprep.subr.mxu0 0.0
    %559 = vmatpush2.msra.mxu0 0.0
    %560 = vmatprep.subr.mxu0 0.0
    %561 = vmatpush2.msra.mxu0 0.0
    %562 = vmatprep.subr.mxu0 0.0
    %563 = vmatpush2.msra.mxu0 0.0
    %564 = vmatprep.subr.mxu0 0.0
    %565 = vmatpush2.msra.mxu0 0.0
    %566 = vmatprep.subr.mxu0 0.0
    %567 = vmatpush2.msra.mxu0 0.0
    %568 = vmatprep.subr.mxu0 0.0
    %569 = vmatpush2.msra.mxu0 0.0
    %570 = vmatprep.subr.mxu0 0.0
    %571 = vmatpush2.msra.mxu0 0.0
    %572 = vmatprep.subr.mxu0 0.0
    %573 = vmatpush2.msra.mxu0 0.0
    %574 = vmatprep.mubr.f32.mxu0 0.0
    %575 = vmatmul.mubr.f32.gmra.mxu0 %v509
    %v576 = vpop.f32.mrf.mxu0
    %v577 = vadd.f32 0.0, %v576
    %v578 = vpop.f32.mrf.mxu0
    %579 = vdwg.mxu0
    %v580 = vadd.f32 %v142, %v577
    %v581 = vtanh.pop %v580
    %582 = vmatprep.subr.mxu0 0.0
    %583 = vmatpush1.msra.mxu0 %v92
    %584 = vmatprep.subr.mxu0 0.0
    %585 = vmatpush1.msra.mxu0 %v91
    %586 = vmatprep.subr.mxu0 0.0
    %587 = vmatpush1.msra.mxu0 %v90
    %588 = vmatprep.subr.mxu0 0.0
    %589 = vmatpush1.msra.mxu0 %v89
    %590 = vmatprep.subr.mxu0 0.0
    %591 = vmatpush1.msra.mxu0 %v88
    %592 = vmatprep.subr.mxu0 0.0
    %593 = vmatpush1.msra.mxu0 %v87
    %594 = vmatprep.subr.mxu0 0.0
    %595 = vmatpush1.msra.mxu0 %v86
    %596 = vmatprep.subr.mxu0 0.0
    %597 = vmatpush1.msra.mxu0 %v85
    %598 = vmatprep.subr.mxu0 0.0
    %599 = vmatpush1.msra.mxu0 %v84
    %600 = vmatprep.subr.mxu0 0.0
    %601 = vmatpush1.msra.mxu0 %v83
    %602 = vmatprep.subr.mxu0 0.0
    %603 = vmatpush1.msra.mxu0 %v82
    %604 = vmatprep.subr.mxu0 0.0
    %605 = vmatpush1.msra.mxu0 %v81
    %606 = vmatprep.subr.mxu0 0.0
    %607 = vmatpush1.msra.mxu0 %v80
    %608 = vmatprep.subr.mxu0 0.0
    %609 = vmatpush1.msra.mxu0 %v79
    %610 = vmatprep.subr.mxu0 0.0
    %611 = vmatpush1.msra.mxu0 %v78
    %612 = vmatprep.subr.mxu0 0.0
    %613 = vmatpush1.msra.mxu0 %v77
    %614 = vmatprep.subr.mxu0 0.0
    %615 = vmatpush2.msra.mxu0 0.0
    %616 = vmatprep.subr.mxu0 0.0
    %617 = vmatpush2.msra.mxu0 0.0
    %618 = vmatprep.subr.mxu0 0.0
    %619 = vmatpush2.msra.mxu0 0.0
    %620 = vmatprep.subr.mxu0 0.0
    %621 = vmatpush2.msra.mxu0 0.0
    %622 = vmatprep.subr.mxu0 0.0
    %623 = vmatpush2.msra.mxu0 0.0
    %624 = vmatprep.subr.mxu0 0.0
    %625 = vmatpush2.msra.mxu0 0.0
    %626 = vmatprep.subr.mxu0 0.0
    %627 = vmatpush2.msra.mxu0 0.0
    %628 = vmatprep.subr.mxu0 0.0
    %629 = vmatpush2.msra.mxu0 0.0
    %630 = vmatprep.subr.mxu0 0.0
    %631 = vmatpush2.msra.mxu0 0.0
    %632 = vmatprep.subr.mxu0 0.0
    %633 = vmatpush2.msra.mxu0 0.0
    %634 = vmatprep.subr.mxu0 0.0
    %635 = vmatpush2.msra.mxu0 0.0
    %636 = vmatprep.subr.mxu0 0.0
    %637 = vmatpush2.msra.mxu0 0.0
    %638 = vmatprep.subr.mxu0 0.0
    %639 = vmatpush2.msra.mxu0 0.0
    %640 = vmatprep.subr.mxu0 0.0
    %641 = vmatpush2.msra.mxu0 0.0
    %642 = vmatprep.subr.mxu0 0.0
    %643 = vmatpush2.msra.mxu0 0.0
    %644 = vmatprep.subr.mxu0 0.0
    %645 = vmatpush2.msra.mxu0 0.0
    %646 = vmatprep.mubr.f32.mxu0 0.0
    %647 = vmatmul.mubr.f32.gmra.mxu0 %v581
    %v648 = vpop.f32.mrf.mxu0
    %v649 = vadd.f32 0.0, %v648
    %v650 = vpop.f32.mrf.mxu0
    %651 = vdwg.mxu0
    %v652 = vadd.f32 %v148, %v649
    %v653 = vtanh.pop %v652
    %v654 = vld [vmem:[#allocation8] sm:$0xff]
    %v655 = vld [vmem:[#allocation8 + $0x8] sm:$0xff]
    %v656 = vld [vmem:[#allocation8 + $0x10] sm:$0xff]
    %v657 = vld [vmem:[#allocation8 + $0x18] sm:$0xff]
    %v658 = vld [vmem:[#allocation8 + $0x20] sm:$0xff]
    %v659 = vld [vmem:[#allocation8 + $0x28] sm:$0xff]
    %v660 = vld [vmem:[#allocation8 + $0x30] sm:$0xff]
    %v661 = vld [vmem:[#allocation8 + $0x38] sm:$0xff]
    %v662 = vld [vmem:[#allocation8 + $0x40] sm:$0xff]
    %v663 = vld [vmem:[#allocation8 + $0x48] sm:$0xff]
    %v664 = vld [vmem:[#allocation8 + $0x50] sm:$0xff]
    %v665 = vld [vmem:[#allocation8 + $0x58] sm:$0xff]
    %v666 = vld [vmem:[#allocation8 + $0x60] sm:$0xff]
    %v667 = vld [vmem:[#allocation8 + $0x68] sm:$0xff]
    %v668 = vld [vmem:[#allocation8 + $0x70] sm:$0xff]
    %v669 = vld [vmem:[#allocation8 + $0x78] sm:$0xff]
    %v670 = vld [vmem:[%s5] sm:$0xff]
    %671 = vmatprep.subr.mxu0 0.0
    %672 = vmatpush1.msra.mxu0 %v669
    %673 = vmatprep.subr.mxu0 0.0
    %674 = vmatpush1.msra.mxu0 %v668
    %675 = vmatprep.subr.mxu0 0.0
    %676 = vmatpush1.msra.mxu0 %v667
    %677 = vmatprep.subr.mxu0 0.0
    %678 = vmatpush1.msra.mxu0 %v666
    %679 = vmatprep.subr.mxu0 0.0
    %680 = vmatpush1.msra.mxu0 %v665
    %681 = vmatprep.subr.mxu0 0.0
    %682 = vmatpush1.msra.mxu0 %v664
    %683 = vmatprep.subr.mxu0 0.0
    %684 = vmatpush1.msra.mxu0 %v663
    %685 = vmatprep.subr.mxu0 0.0
    %686 = vmatpush1.msra.mxu0 %v662
    %687 = vmatprep.subr.mxu0 0.0
    %688 = vmatpush1.msra.mxu0 %v661
    %689 = vmatprep.subr.mxu0 0.0
    %690 = vmatpush1.msra.mxu0 %v660
    %691 = vmatprep.subr.mxu0 0.0
    %692 = vmatpush1.msra.mxu0 %v659
    %693 = vmatprep.subr.mxu0 0.0
    %694 = vmatpush1.msra.mxu0 %v658
    %695 = vmatprep.subr.mxu0 0.0
    %696 = vmatpush1.msra.mxu0 %v657
    %697 = vmatprep.subr.mxu0 0.0
    %698 = vmatpush1.msra.mxu0 %v656
    %699 = vmatprep.subr.mxu0 0.0
    %700 = vmatpush1.msra.mxu0 %v655
    %701 = vmatprep.subr.mxu0 0.0
    %702 = vmatpush1.msra.mxu0 %v654
    %703 = vmatprep.subr.mxu0 0.0
    %704 = vmatpush2.msra.mxu0 0.0
    %705 = vmatprep.subr.mxu0 0.0
    %706 = vmatpush2.msra.mxu0 0.0
    %707 = vmatprep.subr.mxu0 0.0
    %708 = vmatpush2.msra.mxu0 0.0
    %709 = vmatprep.subr.mxu0 0.0
    %710 = vmatpush2.msra.mxu0 0.0
    %711 = vmatprep.subr.mxu0 0.0
    %712 = vmatpush2.msra.mxu0 0.0
    %713 = vmatprep.subr.mxu0 0.0
    %714 = vmatpush2.msra.mxu0 0.0
    %715 = vmatprep.subr.mxu0 0.0
    %716 = vmatpush2.msra.mxu0 0.0
    %717 = vmatprep.subr.mxu0 0.0
    %718 = vmatpush2.msra.mxu0 0.0
    %719 = vmatprep.subr.mxu0 0.0
    %720 = vmatpush2.msra.mxu0 0.0
    %721 = vmatprep.subr.mxu0 0.0
    %722 = vmatpush2.msra.mxu0 0.0
    %723 = vmatprep.subr.mxu0 0.0
    %724 = vmatpush2.msra.mxu0 0.0
    %725 = vmatprep.subr.mxu0 0.0
    %726 = vmatpush2.msra.mxu0 0.0
    %727 = vmatprep.subr.mxu0 0.0
    %728 = vmatpush2.msra.mxu0 0.0
    %729 = vmatprep.subr.mxu0 0.0
    %730 = vmatpush2.msra.mxu0 0.0
    %731 = vmatprep.subr.mxu0 0.0
    %732 = vmatpush2.msra.mxu0 0.0
    %733 = vmatprep.subr.mxu0 0.0
    %734 = vmatpush2.msra.mxu0 0.0
    %735 = vmatprep.mubr.f32.mxu0 0.0
    %736 = vmatmul.mubr.f32.gmra.mxu0 %v653
    %v737 = vpop.f32.mrf.mxu0
    %v738 = vadd.f32 %v670, %v737
    %v739 = vpop.f32.mrf.mxu0
    %740 = vdwg.mxu0
    %741 = vst [vmem:[#allocation10] sm:$0xff] %v738
    // Predicated region
    $region42: #{tpu_custom_call.1} parent=1 // pred_check
      _
    $region43: #{tpu_custom_call.1} parent=1 // pred_check_branch
      %743 = sbr.rel (0) target = $region45
    $region44: #{tpu_custom_call.1} parent=1 // pred_region
      %s745 = ssub.s32 128, 128
      %746 = vsyncadd [#allocation4], %s745
      %s748 = sshll.u32 [#allocation10], 4
      %s749 = int_to_ptr.vmem [resolvable:$true] %s748
      %751 = dma.vmem_to_hbm [thread:$0]  %s749, 128, %s6, [#allocation4]
    $region45: #{tpu_custom_call.1} parent=1 // pred_fallthru
      _
    // Predicated region
    $region46: #{tpu_custom_call.1} parent=1 // pred_check
      _
    $region47: #{tpu_custom_call.1} parent=1 // pred_check_branch
      %753 = sbr.rel (0) target = $region49
    $region48: #{tpu_custom_call.1} parent=1 // pred_region
      %754 = dma.done [#allocation4], 128
    $region49: #{tpu_custom_call.1} parent=1 // pred_fallthru
      _
    %755 = vsyncpa [#allocation3], 1
    %756 = vsyncpa [#allocation6], 1
    %757 = vsyncpa [#allocation9], 1
    %758 = vsyncpa [#allocation4], 1

</llo_original>
